<compile_context>
chip_gen: v6e
topology: v6e:2x2x1
jax: 0.10.0
libtpu: 0.0.40
codegen_flags: <defaults>
</compile_context>

<pallas_src>
import math
import functools

import jax
import jax.numpy as jnp
from jax.experimental import pallas as pl
from jax.experimental.pallas import tpu as pltpu

_PACK = 8  # rows packed per lane-row


def _cdiv(a, b):
    return -(-a // b)


def _round_up(n, m):
    return _cdiv(n, m) * m


def _mog_fused_kernel(phg, pgmd, ph, num_g, x_ref, w_ref, b_ref, out_ref):
    """Fused (folded fc + heads) matmul, per-head softmax, exp; packed rows.

    x_ref   : (TBp, P*K)   packed input rows (P original rows per packed row)
    w_ref   : (P*K, NP)    block-diagonal replicated folded weights
    b_ref   : (1, NP)      replicated folded bias (f32)
    out_ref : (TBp, NP)    packed output slab: [ pi | mu | sigma ]
                           pi columns ordered (gaussian, slot, head),
                           mu/sigma ordered (slot, head, gaussian, dim).
    """
    # One MXU launch covering fc + all three heads for 8 rows at a time.
    # bf16 (or f32) operands, f32 accumulation; bias add in f32.
    y = jnp.dot(x_ref[...], w_ref[...],
                preferred_element_type=jnp.float32) + b_ref[...]

    # --- pi: per-(row, head) softmax --------------------------------------
    # Column layout of the pi slab is gaussian-major, so each gaussian g
    # occupies a contiguous width-`ph` stripe and the per-head max/denominator
    # are simple element-wise ops over stripes (true per-head max -> no
    # underflow when heads have widely separated logit scales).
    logits = y[:, :phg]                       # (TBp, P*H*G), f32
    m = logits[:, :ph]
    for g in range(1, num_g):
        m = jnp.maximum(m, logits[:, g * ph:(g + 1) * ph])
    e = jnp.exp(logits - jnp.concatenate([m] * num_g, axis=-1))
    d = e[:, :ph]
    for g in range(1, num_g):
        d = d + e[:, g * ph:(g + 1) * ph]
    pi = e / jnp.concatenate([d] * num_g, axis=-1)   # exact divide

    # --- sigma: ELU(exp(.)) + 1e-15 == exp(.) + 1e-15 ----------------------
    sigma = jnp.exp(y[:, phg + pgmd:]) + 1e-15

    # --- three direct sub-range stores (mu untouched; no concat/relayout) --
    out_ref[:, :phg] = pi
    out_ref[:, phg:phg + pgmd] = y[:, phg:phg + pgmd]
    out_ref[:, phg + pgmd:] = sigma


def mixture_decoder_multihead_forward(x, params, *, num_heads, num_gaussians,
                                      output_dim, block_rows=4096,
                                      input_dtype=jnp.bfloat16):
    """Fused forward. Returns PyTorch-shaped (pi, mu, sigma):
       pi: (B, H, G), mu/sigma: (B, H, G, D).  Output is always f32."""
    B, K = x.shape
    H, G, D = num_heads, num_gaussians, output_dim
    HG, GMD = H * G, H * G * D
    P = _PACK
    PK, PHG, PGMD, PH = P * K, P * HG, P * GMD, P * H
    NP = PHG + 2 * PGMD
    f32 = jnp.float32
    hp = jax.lax.Precision.HIGHEST

    # ---- Fold fc into the three heads (tiny one-time precompute). ---------
    fc_w = params["fc_w"].astype(f32)
    fc_b = params["fc_b"].astype(f32)
    w_pi = jnp.dot(fc_w, params["pi_w"].astype(f32), precision=hp)      # (K, HG)  cols (h,g)
    w_mu = jnp.dot(fc_w, params["mu_w"].astype(f32), precision=hp)      # (K, GMD) cols (h,g,d)
    w_sg = jnp.dot(fc_w, params["sigma_w"].astype(f32), precision=hp)
    b_pi = jnp.dot(fc_b, params["pi_w"].astype(f32), precision=hp) + params["pi_b"].astype(f32)
    b_mu = jnp.dot(fc_b, params["mu_w"].astype(f32), precision=hp) + params["mu_b"].astype(f32)
    b_sg = jnp.dot(fc_b, params["sigma_w"].astype(f32), precision=hp) + params["sigma_b"].astype(f32)

    # ---- Row packing: block-diagonal replication of the folded weights. ---
    eye_p = jnp.eye(P, dtype=f32)
    w_mu_rep = jnp.kron(eye_p, w_mu)            # (PK, PGMD), cols (slot | h,g,d)
    w_sg_rep = jnp.kron(eye_p, w_sg)
    w_pi_k = jnp.kron(eye_p, w_pi)              # (PK, PHG),  cols (slot | h,g)
    # Permute pi columns to gaussian-major (g, slot, head) order so the kernel
    # can do the per-head softmax with contiguous lane stripes.
    g_i, s_i, h_i = jnp.meshgrid(jnp.arange(G), jnp.arange(P), jnp.arange(H),
                                 indexing="ij")
    perm = (s_i * HG + h_i * G + g_i).reshape(-1)      # new (g,s,h) -> old (s | h,g)
    w_pi_rep = w_pi_k[:, perm]
    b_pi_rep = jnp.tile(b_pi, (1, P))[:, perm]
    b_mu_rep = jnp.tile(b_mu, (1, P))
    b_sg_rep = jnp.tile(b_sg, (1, P))

    w_rep = jnp.concatenate([w_pi_rep, w_mu_rep, w_sg_rep], axis=1).astype(input_dtype)  # (PK, NP)
    b_rep = jnp.concatenate([b_pi_rep, b_mu_rep, b_sg_rep], axis=1).astype(f32)          # (1, NP)

    # ---- Batch tiling over packed rows (even split bounds padding waste). -
    n_packed = _cdiv(B, P)
    tbp_cap = max(1, block_rows // P)
    # Force >=2 grid steps only when the batch is large enough that the padding
    # from tile rounding stays small; keeps both v7x TCs busy for large B.
    min_blocks = 2 if n_packed >= 256 else 1
    n_blocks = max(min_blocks, _cdiv(n_packed, tbp_cap))
    if n_blocks == 1:
        tbp = n_packed                               # full extent (always legal)
    else:
        tbp = _round_up(_cdiv(n_packed, n_blocks), 16)   # sublane-safe for bf16 & f32
    n_packed_p = _round_up(n_packed, tbp)
    grid = (n_packed_p // tbp,)

    rows_p = n_packed_p * P
    x_p = x.astype(input_dtype)
    if rows_p != B:
        x_p = jnp.pad(x_p, ((0, rows_p - B), (0, 0)))
    x_packed = x_p.reshape(n_packed_p, PK)

    kernel = functools.partial(_mog_fused_kernel, PHG, PGMD, PH, G)
    in_bytes = jnp.dtype(input_dtype).itemsize

    out_packed = pl.pallas_call(
        kernel,
        out_shape=jax.ShapeDtypeStruct((n_packed_p, NP), f32),
        grid_spec=pltpu.PrefetchScalarGridSpec(
            num_scalar_prefetch=0,
            grid=grid,
            in_specs=[
                pl.BlockSpec((tbp, PK), lambda i: (i, 0)),   # streamed packed input rows
                pl.BlockSpec((PK, NP), lambda i: (0, 0)),    # resident replicated weights
                pl.BlockSpec((1, NP), lambda i: (0, 0)),     # resident replicated bias
            ],
            out_specs=pl.BlockSpec((tbp, NP), lambda i: (i, 0)),
        ),
        compiler_params=pltpu.CompilerParams(
            # batch axis is embarrassingly parallel -> shard over v7x's 2 TCs
            dimension_semantics=("parallel",),
        ),
        cost_estimate=pl.CostEstimate(
            flops=2 * n_packed_p * PK * NP,
            transcendentals=n_packed_p * (PHG + PGMD),
            bytes_accessed=(n_packed_p * PK * in_bytes      # x (bf16 by default)
                            + PK * NP * in_bytes            # replicated weights
                            + NP * 4                        # bias
                            + n_packed_p * NP * 4),         # f32 output slab
        ),
    )(x_packed, w_rep, b_rep)

    # ---- Unpack to the PyTorch shapes (cheap plain-JAX glue). -------------
    pi_blk = out_packed[:, :PHG]                 # cols (g, slot, head)
    mu_blk = out_packed[:, PHG:PHG + PGMD]       # cols (slot, h, g, d)
    sg_blk = out_packed[:, PHG + PGMD:]
    pi = pi_blk.reshape(n_packed_p, G, P, H).transpose(0, 2, 3, 1).reshape(-1, H, G)[:B]
    mu = mu_blk.reshape(n_packed_p * P, H, G, D)[:B]
    sigma = sg_blk.reshape(n_packed_p * P, H, G, D)[:B]
    return pi, mu, sigma


def init_params(key, input_dim, hidden=32, num_heads=1, num_gaussians=2,
                output_dim=2):
    """Deterministic synthetic init mirroring the module's __init__ shapes.
    Linear weights are stored PRE-TRANSPOSED as (in, out)."""
    H, G, D = num_heads, num_gaussians, output_dim
    k = jax.random.split(key, 6)

    def uniform(key, shape, bound):
        return jax.random.uniform(key, shape, jnp.float32, -bound, bound)

    fc_bound = 1.0 / math.sqrt(input_dim)
    fc_w = uniform(k[0], (input_dim, hidden), fc_bound)
    fc_b = uniform(k[1], (1, hidden), fc_bound)

    pi_out = H * G
    pi_gain = math.sqrt(6.0 / (hidden + pi_out))
    pi_w = uniform(k[2], (hidden, pi_out), pi_gain)
    pi_b = jnp.zeros((1, pi_out), jnp.float32)

    gm_out = H * G * D
    std = math.sqrt(2.0 / (hidden + gm_out))
    sigma_w = std * jax.random.normal(k[3], (hidden, gm_out), jnp.float32)
    sigma_b = jnp.zeros((1, gm_out), jnp.float32)
    mu_w = std * jax.random.normal(k[4], (hidden, gm_out), jnp.float32)
    mu_b = jnp.zeros((1, gm_out), jnp.float32)

    return dict(fc_w=fc_w, fc_b=fc_b, pi_w=pi_w, pi_b=pi_b,
                sigma_w=sigma_w, sigma_b=sigma_b, mu_w=mu_w, mu_b=mu_b)


def _reference_forward(x, params, *, num_heads, num_gaussians, output_dim):
    """Pure-JAX reference of the PyTorch forward (eval mode), high precision."""
    B = x.shape[0]
    H, G, D = num_heads, num_gaussians, output_dim
    dot = functools.partial(jnp.dot, precision=jax.lax.Precision.HIGHEST)
    h = dot(x, params["fc_w"]) + params["fc_b"]
    logits = (dot(h, params["pi_w"]) + params["pi_b"]).reshape(B, H, G)
    pi = jax.nn.softmax(logits, axis=2)
    sigma = jnp.exp(dot(h, params["sigma_w"]) + params["sigma_b"]).reshape(B, H, G, D)
    sigma = jnp.where(sigma > 0, sigma, jnp.exp(sigma) - 1.0) + 1e-15   # literal ELU
    mu = (dot(h, params["mu_w"]) + params["mu_b"]).reshape(B, H, G, D)
    return pi, mu, sigma


if __name__ == "__main__":
    INPUT_DIM = 16
    NUM_HEADS = 2
    NUM_GAUSSIANS = 3
    OUTPUT_DIM = 2
    BATCH = 8

    key = jax.random.PRNGKey(0)
    kx, kp, kx2 = jax.random.split(key, 3)
    params = init_params(kp, INPUT_DIM, hidden=32, num_heads=NUM_HEADS,
                         num_gaussians=NUM_GAUSSIANS, output_dim=OUTPUT_DIM)

    fwd = functools.partial(mixture_decoder_multihead_forward,
                            num_heads=NUM_HEADS, num_gaussians=NUM_GAUSSIANS,
                            output_dim=OUTPUT_DIM)
    ref = functools.partial(_reference_forward,
                            num_heads=NUM_HEADS, num_gaussians=NUM_GAUSSIANS,
                            output_dim=OUTPUT_DIM)

    # ---- small batch, exact-math (f32 streaming) check ---------------------
    x = jax.random.normal(kx, (BATCH, INPUT_DIM), jnp.float32)
    pi, mu, sigma = fwd(x, params, input_dtype=jnp.float32)
    jax.block_until_ready((pi, mu, sigma))
    pi_r, mu_r, sigma_r = ref(x, params)
    assert pi.shape == (BATCH, NUM_HEADS, NUM_GAUSSIANS)
    assert mu.shape == (BATCH, NUM_HEADS, NUM_GAUSSIANS, OUTPUT_DIM)
    assert sigma.shape == (BATCH, NUM_HEADS, NUM_GAUSSIANS, OUTPUT_DIM)
    assert jnp.allclose(pi, pi_r, rtol=1e-5, atol=1e-5)
    assert jnp.allclose(mu, mu_r, rtol=1e-5, atol=1e-5)
    assert jnp.allclose(sigma, sigma_r, rtol=1e-5, atol=1e-5)

    # ---- larger batch: exercises multi-step grid + row padding -------------
    x2 = jax.random.normal(kx2, (600, INPUT_DIM), jnp.float32)
    pi2, mu2, sigma2 = fwd(x2, params, input_dtype=jnp.float32, block_rows=128)
    jax.block_until_ready((pi2, mu2, sigma2))
    pi2_r, mu2_r, sigma2_r = ref(x2, params)
    assert jnp.allclose(pi2, pi2_r, rtol=1e-5, atol=1e-5)
    assert jnp.allclose(mu2, mu2_r, rtol=1e-5, atol=1e-5)
    assert jnp.allclose(sigma2, sigma2_r, rtol=1e-5, atol=1e-5)

    # ---- default fast path: bf16 streaming of x / weights, f32 accum -------
    # (bf16 inputs carry ~0.4% relative rounding; tolerance documented.)
    pi_b, mu_b, sigma_b = fwd(x, params)          # input_dtype defaults to bf16
    jax.block_until_ready((pi_b, mu_b, sigma_b))
    assert jnp.allclose(pi_b, pi_r, rtol=5e-2, atol=5e-2)
    assert jnp.allclose(mu_b, mu_r, rtol=5e-2, atol=5e-2)
    assert jnp.allclose(sigma_b, sigma_r, rtol=5e-2, atol=5e-2)

    print("KERNEL_OK")
</pallas_src>

<mosaic_0001>
module attributes {stable_mosaic.version = 11 : i64} {
  func.func @_mog_fused_kernel(%arg0: i32, %arg1: memref<1x128xf32, #tpu.memory_space<vmem>>, %arg2: memref<128x240xf32, #tpu.memory_space<vmem>>, %arg3: memref<1x240xf32, #tpu.memory_space<vmem>>, %arg4: memref<1x240xf32, #tpu.memory_space<vmem>>) attributes {dimension_semantics = [#tpu.dimension_semantics<parallel>], iteration_bounds = array<i64: 1>, scalar_prefetch = 0 : i64, scratch_operands = 0 : i64, tpu.core_type = #tpu.core_type<tc>, window_params = [{transform_indices = @transform_0, window_bounds = array<i64: 1, 128>}, {pipeline_mode = #tpu.pipeline_mode<synchronous>, transform_indices = @transform_1, window_bounds = array<i64: 128, 240>}, {pipeline_mode = #tpu.pipeline_mode<synchronous>, transform_indices = @transform_2, window_bounds = array<i64: 1, 240>}, {transform_indices = @transform_3, window_bounds = array<i64: 1, 240>}]} {
    %c0 = arith.constant 0 : index
    %c0_0 = arith.constant 0 : index
    %0 = vector.load %arg1[%c0, %c0_0] : memref<1x128xf32, #tpu.memory_space<vmem>>, vector<1x128xf32>
    %c0_1 = arith.constant 0 : index
    %c0_2 = arith.constant 0 : index
    %1 = vector.load %arg2[%c0_1, %c0_2] : memref<128x240xf32, #tpu.memory_space<vmem>>, vector<128x240xf32>
    %cst = arith.constant dense<0.000000e+00> : vector<1x240xf32>
    %2 = tpu.matmul %0, %1, %cst {dimension_numbers = #tpu.dot_dimension_numbers<[1], [0], [0], [1], [0, 0, 1, 1], [], []>} : vector<1x128xf32>, vector<128x240xf32>, vector<1x240xf32> -> vector<1x240xf32>
    %c0_3 = arith.constant 0 : index
    %c0_4 = arith.constant 0 : index
    %3 = vector.load %arg3[%c0_3, %c0_4] : memref<1x240xf32, #tpu.memory_space<vmem>>, vector<1x240xf32>
    %4 = arith.addf %2, %3 : vector<1x240xf32>
    %5 = vector.extract_strided_slice %4 {offsets = [0, 0], sizes = [1, 48], strides = [1, 1]} : vector<1x240xf32> to vector<1x48xf32>
    %6 = vector.extract_strided_slice %5 {offsets = [0, 0], sizes = [1, 16], strides = [1, 1]} : vector<1x48xf32> to vector<1x16xf32>
    %7 = vector.extract_strided_slice %5 {offsets = [0, 16], sizes = [1, 16], strides = [1, 1]} : vector<1x48xf32> to vector<1x16xf32>
    %8 = arith.maximumf %6, %7 : vector<1x16xf32>
    %9 = vector.extract_strided_slice %5 {offsets = [0, 32], sizes = [1, 16], strides = [1, 1]} : vector<1x48xf32> to vector<1x16xf32>
    %10 = arith.maximumf %8, %9 : vector<1x16xf32>
    %11 = tpu.concatenate %10, %10, %10 in 1 : vector<1x16xf32>, vector<1x16xf32>, vector<1x16xf32> -> vector<1x48xf32>
    %12 = arith.subf %5, %11 : vector<1x48xf32>
    %13 = math.exp %12 : vector<1x48xf32>
    %14 = vector.extract_strided_slice %13 {offsets = [0, 0], sizes = [1, 16], strides = [1, 1]} : vector<1x48xf32> to vector<1x16xf32>
    %15 = vector.extract_strided_slice %13 {offsets = [0, 16], sizes = [1, 16], strides = [1, 1]} : vector<1x48xf32> to vector<1x16xf32>
    %16 = arith.addf %14, %15 : vector<1x16xf32>
    %17 = vector.extract_strided_slice %13 {offsets = [0, 32], sizes = [1, 16], strides = [1, 1]} : vector<1x48xf32> to vector<1x16xf32>
    %18 = arith.addf %16, %17 : vector<1x16xf32>
    %19 = tpu.concatenate %18, %18, %18 in 1 : vector<1x16xf32>, vector<1x16xf32>, vector<1x16xf32> -> vector<1x48xf32>
    %20 = arith.divf %13, %19 : vector<1x48xf32>
    %21 = vector.extract_strided_slice %4 {offsets = [0, 144], sizes = [1, 96], strides = [1, 1]} : vector<1x240xf32> to vector<1x96xf32>
    %22 = math.exp %21 : vector<1x96xf32>
    %cst_5 = arith.constant 1.000000e-15 : f32
    %23 = vector.broadcast %cst_5 : f32 to vector<1x96xf32>
    %24 = arith.addf %22, %23 : vector<1x96xf32>
    %c0_6 = arith.constant 0 : index
    %c0_7 = arith.constant 0 : index
    %25 = vector.load %arg4[%c0_6, %c0_7] : memref<1x240xf32, #tpu.memory_space<vmem>>, vector<1x48xf32>
    tpu.vector_store %arg4[%c0_6, %c0_7], %20 {strides = array<i32>} : memref<1x240xf32, #tpu.memory_space<vmem>>, vector<1x48xf32>,
    %26 = vector.extract_strided_slice %4 {offsets = [0, 48], sizes = [1, 96], strides = [1, 1]} : vector<1x240xf32> to vector<1x96xf32>
    %c0_8 = arith.constant 0 : index
    %c48 = arith.constant 48 : index
    %27 = vector.load %arg4[%c0_8, %c48] : memref<1x240xf32, #tpu.memory_space<vmem>>, vector<1x96xf32>
    tpu.vector_store %arg4[%c0_8, %c48], %26 {strides = array<i32>} : memref<1x240xf32, #tpu.memory_space<vmem>>, vector<1x96xf32>,
    %c0_9 = arith.constant 0 : index
    %c144 = arith.constant 144 : index
    %28 = vector.load %arg4[%c0_9, %c144] : memref<1x240xf32, #tpu.memory_space<vmem>>, vector<1x96xf32>
    tpu.vector_store %arg4[%c0_9, %c144], %24 {strides = array<i32>} : memref<1x240xf32, #tpu.memory_space<vmem>>, vector<1x96xf32>,
    return
  }
  func.func @transform_0(%arg0: i32) -> (i32, i32) {
    %c0_i32 = arith.constant 0 : i32
    %c0_i32_0 = arith.constant 0 : i32
    return %arg0, %c0_i32 : i32, i32
  }
  func.func @transform_1(%arg0: i32) -> (i32, i32) {
    %c0_i32 = arith.constant 0 : i32
    %c0_i32_0 = arith.constant 0 : i32
    %c0_i32_1 = arith.constant 0 : i32
    return %c0_i32, %c0_i32_0 : i32, i32
  }
  func.func @transform_2(%arg0: i32) -> (i32, i32) {
    %c0_i32 = arith.constant 0 : i32
    %c0_i32_0 = arith.constant 0 : i32
    %c0_i32_1 = arith.constant 0 : i32
    return %c0_i32, %c0_i32_0 : i32, i32
  }
  func.func @transform_3(%arg0: i32) -> (i32, i32) {
    %c0_i32 = arith.constant 0 : i32
    %c0_i32_0 = arith.constant 0 : i32
    return %arg0, %c0_i32 : i32, i32
  }
}

</mosaic_0001>

<llo_original>
// kernel: tpu_custom_call.1
$region0: #{tpu_custom_call.1}
  #allocation0 [shape = 'u32[]', space=smem, size = 0x4, offset = 0x4, fixed_abs, tag = 'smem constant byte address 0x4 - core index']
  #allocation1 [shape = 'u32[144,128]{1,0:T(1,128)}', space=vmem, size = 0x12000, scoped, tag = 'internal scratch']
  %s0 = inlined_call_operand.vmem [shape: f32[1,128], index: 0, kind: input, shape index: {}]
  %s1 = inlined_call_operand.vmem [shape: f32[128,240], index: 1, kind: input, shape index: {}]
  %s2 = inlined_call_operand.vmem [shape: f32[1,240], index: 2, kind: input, shape index: {}]
  %s3 = inlined_call_operand.hbm [shape: f32[1,240], index: 3, kind: output, shape index: {}]
  %s4 = sld [smem:[#allocation0]]
  $region22: #{tpu_custom_call.1} parent=0
    _
  %s6 = ssub.s32 1, %s4
  %s7 = scalar_select 0, %s6, %s4
  $region1: #{tpu_custom_call.1} parent=0
    #allocation2 [shape = 'u8[1024]{0}', space=vmem, size = 0x400, scoped, tag = 'output window, operand 0, single buffered']
    #allocation3 [shape = 's32[1]{0}', space=sflag, size = 0x4, scoped, tag = 'scoped memory for tpu_custom_call.1']
    %8 = vsyncpa [#allocation3], 0
    // Predicated region
    $region2: #{tpu_custom_call.1} parent=1 // pred_check
      _
    $region3: #{tpu_custom_call.1} parent=1 // pred_check_branch
      %10 = sbr.rel (0) target = $region5
    $region4: #{tpu_custom_call.1} parent=1 // pred_region
      _
    $region5: #{tpu_custom_call.1} parent=1 // pred_fallthru
      _
    // Predicated region
    $region6: #{tpu_custom_call.1} parent=1 // pred_check
      _
    $region7: #{tpu_custom_call.1} parent=1 // pred_check_branch
      %12 = sbr.rel (0) target = $region9
    $region8: #{tpu_custom_call.1} parent=1 // pred_region
      _
    $region9: #{tpu_custom_call.1} parent=1 // pred_fallthru
      _
    // Predicated region
    $region10: #{tpu_custom_call.1} parent=1 // pred_check
      _
    $region11: #{tpu_custom_call.1} parent=1 // pred_check_branch
      %14 = sbr.rel (0) target = $region13
    $region12: #{tpu_custom_call.1} parent=1 // pred_region
      _
    $region13: #{tpu_custom_call.1} parent=1 // pred_fallthru
      _
    %v15 = vld [vmem:[%s0] sm:$0x1]
    %v16 = vld [vmem:[%s1] sm:$0xff]
    %v17 = vld [vmem:[%s1 + $0x8] sm:$0xff]
    %v18 = vld [vmem:[%s1 + $0x10] sm:$0xff]
    %v19 = vld [vmem:[%s1 + $0x18] sm:$0xff]
    %v20 = vld [vmem:[%s1 + $0x20] sm:$0xff]
    %v21 = vld [vmem:[%s1 + $0x28] sm:$0xff]
    %v22 = vld [vmem:[%s1 + $0x30] sm:$0xff]
    %v23 = vld [vmem:[%s1 + $0x38] sm:$0xff]
    %v24 = vld [vmem:[%s1 + $0x40] sm:$0xff]
    %v25 = vld [vmem:[%s1 + $0x48] sm:$0xff]
    %v26 = vld [vmem:[%s1 + $0x50] sm:$0xff]
    %v27 = vld [vmem:[%s1 + $0x58] sm:$0xff]
    %v28 = vld [vmem:[%s1 + $0x60] sm:$0xff]
    %v29 = vld [vmem:[%s1 + $0x68] sm:$0xff]
    %v30 = vld [vmem:[%s1 + $0x70] sm:$0xff]
    %v31 = vld [vmem:[%s1 + $0x78] sm:$0xff]
    %v32 = vld [vmem:[%s1 + $0x80] sm:$0xff]
    %v33 = vld [vmem:[%s1 + $0x88] sm:$0xff]
    %v34 = vld [vmem:[%s1 + $0x90] sm:$0xff]
    %v35 = vld [vmem:[%s1 + $0x98] sm:$0xff]
    %v36 = vld [vmem:[%s1 + $0xa0] sm:$0xff]
    %v37 = vld [vmem:[%s1 + $0xa8] sm:$0xff]
    %v38 = vld [vmem:[%s1 + $0xb0] sm:$0xff]
    %v39 = vld [vmem:[%s1 + $0xb8] sm:$0xff]
    %v40 = vld [vmem:[%s1 + $0xc0] sm:$0xff]
    %v41 = vld [vmem:[%s1 + $0xc8] sm:$0xff]
    %v42 = vld [vmem:[%s1 + $0xd0] sm:$0xff]
    %v43 = vld [vmem:[%s1 + $0xd8] sm:$0xff]
    %v44 = vld [vmem:[%s1 + $0xe0] sm:$0xff]
    %v45 = vld [vmem:[%s1 + $0xe8] sm:$0xff]
    %v46 = vld [vmem:[%s1 + $0xf0] sm:$0xff]
    %v47 = vld [vmem:[%s1 + $0xf8] sm:$0xff]
    %v48 = vld [vmem:[%s2] sm:$0x3]
    %v50 = vlaneseq
    %v51 = vshrl.u32 %v50, 7
    %v52 = vsub.s32 0, %v51
    %v53 = vrot.slane %v48, %v52
    %v54 = vlaneseq
    %v55 = vshrl.u32 %v54, 7
    %v56 = vsub.s32 1, %v55
    %v57 = vrot.slane %v48, %v56
    %60 = vmatprep.subr.mxu0 %v47
    %61 = vmatpush1.msra.mxu0 %v46
    %62 = vmatprep.subr.mxu0 %v45
    %63 = vmatpush1.msra.mxu0 %v44
    %64 = vmatprep.subr.mxu0 %v43
    %65 = vmatpush1.msra.mxu0 %v42
    %66 = vmatprep.subr.mxu0 %v41
    %67 = vmatpush1.msra.mxu0 %v40
    %68 = vmatprep.subr.mxu0 %v39
    %69 = vmatpush1.msra.mxu0 %v38
    %70 = vmatprep.subr.mxu0 %v37
    %71 = vmatpush1.msra.mxu0 %v36
    %72 = vmatprep.subr.mxu0 %v35
    %73 = vmatpush1.msra.mxu0 %v34
    %74 = vmatprep.subr.mxu0 %v33
    %75 = vmatpush1.msra.mxu0 %v32
    %76 = vmatprep.subr.mxu0 %v31
    %77 = vmatpush1.msra.mxu0 %v30
    %78 = vmatprep.subr.mxu0 %v29
    %79 = vmatpush1.msra.mxu0 %v28
    %80 = vmatprep.subr.mxu0 %v27
    %81 = vmatpush1.msra.mxu0 %v26
    %82 = vmatprep.subr.mxu0 %v25
    %83 = vmatpush1.msra.mxu0 %v24
    %84 = vmatprep.subr.mxu0 %v23
    %85 = vmatpush1.msra.mxu0 %v22
    %86 = vmatprep.subr.mxu0 %v21
    %87 = vmatpush1.msra.mxu0 %v20
    %88 = vmatprep.subr.mxu0 %v19
    %89 = vmatpush1.msra.mxu0 %v18
    %90 = vmatprep.subr.mxu0 %v17
    %91 = vmatpush1.msra.mxu0 %v16
    %92 = vmatprep.subr.mxu0 0.0
    %93 = vmatpush2.msra.mxu0 0.0
    %94 = vmatprep.subr.mxu0 0.0
    %95 = vmatpush2.msra.mxu0 0.0
    %96 = vmatprep.subr.mxu0 0.0
    %97 = vmatpush2.msra.mxu0 0.0
    %98 = vmatprep.subr.mxu0 0.0
    %99 = vmatpush2.msra.mxu0 0.0
    %100 = vmatprep.subr.mxu0 0.0
    %101 = vmatpush2.msra.mxu0 0.0
    %102 = vmatprep.subr.mxu0 0.0
    %103 = vmatpush2.msra.mxu0 0.0
    %104 = vmatprep.subr.mxu0 0.0
    %105 = vmatpush2.msra.mxu0 0.0
    %106 = vmatprep.subr.mxu0 0.0
    %107 = vmatpush2.msra.mxu0 0.0
    %108 = vmatprep.subr.mxu0 0.0
    %109 = vmatpush2.msra.mxu0 0.0
    %110 = vmatprep.subr.mxu0 0.0
    %111 = vmatpush2.msra.mxu0 0.0
    %112 = vmatprep.subr.mxu0 0.0
    %113 = vmatpush2.msra.mxu0 0.0
    %114 = vmatprep.subr.mxu0 0.0
    %115 = vmatpush2.msra.mxu0 0.0
    %116 = vmatprep.subr.mxu0 0.0
    %117 = vmatpush2.msra.mxu0 0.0
    %118 = vmatprep.subr.mxu0 0.0
    %119 = vmatpush2.msra.mxu0 0.0
    %120 = vmatprep.subr.mxu0 0.0
    %121 = vmatpush2.msra.mxu0 0.0
    %122 = vmatprep.subr.mxu0 0.0
    %123 = vmatpush2.msra.mxu0 0.0
    %124 = vmatprep.mubr.f32.mxu0 0.0
    %125 = vmatmul.mubr.f32.gmra.mxu0 %v15
    %v126 = vpop.f32.mrf.mxu0
    %v127 = vadd.f32 %v53, %v126
    %v128 = vpop.f32.mrf.mxu0
    %v129 = vadd.f32 %v57, %v128
    %130 = vdwg.mxu0
    %132 = vrot.lane.b32.xlu0 %v127, 112
    %v133 = vpop.permute.xlu0 %132
    %v135 = vmax.f32 %v127, %v133
    %136 = vrot.lane.b32.xlu0 %v127, 96
    %v137 = vpop.permute.xlu0 %136
    %v139 = vmax.f32 %v135, %v137
    %141 = vrot.lane.b32.xlu0 %v139, 16
    %v142 = vpop.permute.xlu0 %141
    %144 = vrot.lane.b32.xlu0 %v139, 32
    %v145 = vpop.permute.xlu0 %144
    %vm147 = vcmask 130048
    %v148 = vsel %vm147, %v139, %v142
    %vm149 = vcmask 261120
    %v150 = vsel %vm149, %v148, %v145
    %v151 = vsub.f32 %v127, %v150
    %v152 = vmul.f32 %v151, 1.442695
    %v153 = vpow.pop %v152
    %155 = vrot.lane.b32.xlu0 %v153, 112
    %v156 = vpop.permute.xlu0 %155
    %v158 = vadd.f32 %v153, %v156
    %159 = vrot.lane.b32.xlu0 %v153, 96
    %v160 = vpop.permute.xlu0 %159
    %v162 = vadd.f32 %v158, %v160
    %164 = vrot.lane.b32.xlu0 %v162, 16
    %v165 = vpop.permute.xlu0 %164
    %167 = vrot.lane.b32.xlu0 %v162, 32
    %v168 = vpop.permute.xlu0 %167
    %v170 = vsel %vm147, %v162, %v165
    %v171 = vsel %vm149, %v170, %v168
    %v172 = vrcp.pop %v171
    %v173 = vmul.f32 %v153, %v172
    %v174 = vmul.f32 %v129, 1.442695
    %v175 = vpow.pop %v174
    %v176 = vadd.f32 %v175, 1e-15
    %v177 = vlaneseq
    %vm178 = vcmp.ge.s32.totalorder %v177, 0
    %vm179 = vcmp.lt.s32.totalorder %v177, 48
    %vm180 = vmand %vm178, %vm179
    %181 = vst.msk [vmem:[#allocation2] sm:$0x1] %vm180, %v173
    %v183 = vcombine.low %v127, %v129
    %v185 = vunpack.c.l.s4 1966171168
    %v186 = vunpack.c.0.s8 %v185
    %v187 = vlaneseq
    %v188 = vshrl.u32 %v187, 7
    %v189 = vsub.s32 %v186, %v188
    %v190 = vrot.slane %v183, %v189
    %v192 = vunpack.c.l.s4 1966171168
    %v193 = vunpack.c.0.s8 %v192
    %v194 = vlaneseq
    %v195 = vshrl.u32 %v194, 7
    %v196 = vsub.s32 %v193, %v195
    %v197 = vrot.slane %v190, %v196
    %vm199 = vcmp.ge.s32.totalorder %v177, 48
    %vm200 = vcmp.lt.s32.totalorder %v177, 144
    %vm201 = vmand %vm199, %vm200
    %202 = vst.msk [vmem:[#allocation2] sm:$0x3] %vm201, %v197
    %vm203 = vcmp.ge.s32.totalorder %v177, 16
    %vm204 = vcmp.lt.s32.totalorder %v177, 112
    %vm205 = vmand %vm203, %vm204
    %206 = vst.msk [vmem:[#allocation2 + $0x1] sm:$0x1] %vm205, %v176
    // Predicated region
    $region14: #{tpu_custom_call.1} parent=1 // pred_check
      _
    $region15: #{tpu_custom_call.1} parent=1 // pred_check_branch
      %208 = sbr.rel (0) target = $region17
    $region16: #{tpu_custom_call.1} parent=1 // pred_region
      %s210 = ssub.s32 32, 32
      %211 = vsyncadd [#allocation3], %s210
      %s213 = sshll.u32 [#allocation2], 4
      %s214 = int_to_ptr.vmem [resolvable:$true] %s213
      %216 = dma.vmem_to_hbm [thread:$0]  %s214, 32, %s3, [#allocation3]
    $region17: #{tpu_custom_call.1} parent=1 // pred_fallthru
      _
    // Predicated region
    $region18: #{tpu_custom_call.1} parent=1 // pred_check
      _
    $region19: #{tpu_custom_call.1} parent=1 // pred_check_branch
      %218 = sbr.rel (0) target = $region21
    $region20: #{tpu_custom_call.1} parent=1 // pred_region
      %219 = dma.done [#allocation3], 32
    $region21: #{tpu_custom_call.1} parent=1 // pred_fallthru
      _
    %220 = vsyncpa [#allocation3], 1

</llo_original>
